<compile_context>
chip_gen: v6e
topology: v6e:2x2x1
jax: 0.10.0
libtpu: 0.0.40
codegen_flags: <defaults>
</compile_context>

<pallas_src>
import jax
import jax.numpy as jnp
from jax.experimental import pallas as pl
from jax.experimental.pallas import tpu as pltpu


def _conv1x1_bn_relu_kernel(x_ref, w_ref, b_ref, o_ref):
    # x_ref: (1, Cin, TP)   activations at ORIGINAL resolution (lane-dense TP)
    # w_ref: (Cout, Cin)    1x1 conv weight with BN scale folded in
    # b_ref: (Cout, 1)      folded bias (conv bias + BN shift), f32
    # o_ref: (1, Cout, TP)
    y = jnp.dot(w_ref[...], x_ref[0], preferred_element_type=jnp.float32)  # MXU
    y = y + b_ref[...]                                                     # VPU epilogue
    o_ref[0] = jnp.maximum(y, 0.0).astype(o_ref.dtype)


def _spatial_tile(P, target=2048):
    """Largest multiple-of-128 divisor of P that is <= target (prefer >=2 tiles)."""
    if P % 128 != 0:
        return P                      # single full-extent block (toy/odd shapes)
    best = 128
    cand = 128
    while cand <= min(P, target):
        if P % cand == 0:
            best = cand
        cand += 128
    # Give the pipeline at least 2 spatial steps per batch element when possible.
    if best == P and P >= 256 and (P // 2) % 128 == 0:
        best = P // 2
    return best


def upsampling_wo_skip(x, w, b, gamma, beta, running_mean, running_var,
                       eps=1e-5, compute_dtype=None, spatial_tile_target=2048):
    """x: (N, C, H, W) NCHW like PyTorch.  Returns (N, C//2, 2H, 2W)."""
    N, C, H, W = x.shape
    Cout = w.shape[0]
    P = H * W

    # Fold eval-mode BatchNorm into the conv: scale into the weight, shift+conv
    # bias into a single per-channel bias.
    scale = gamma.astype(jnp.float32) / jnp.sqrt(running_var.astype(jnp.float32) + eps)
    bias_f = ((b.astype(jnp.float32) - running_mean.astype(jnp.float32)) * scale
              + beta.astype(jnp.float32)).reshape(Cout, 1)

    cdt = jnp.dtype(compute_dtype) if compute_dtype is not None else x.dtype
    w_f = (w.astype(jnp.float32) * scale[:, None]).astype(cdt)

    x3 = x.reshape(N, C, P)           # free reshape, NO upsample materialized
    if x3.dtype != cdt:
        x3 = x3.astype(cdt)

    TP = _spatial_tile(P, spatial_tile_target)
    grid = (N, P // TP)

    y = pl.pallas_call(
        _conv1x1_bn_relu_kernel,
        out_shape=jax.ShapeDtypeStruct((N, Cout, P), x.dtype),
        grid_spec=pltpu.PrefetchScalarGridSpec(
            num_scalar_prefetch=0,
            grid=grid,
            in_specs=[
                pl.BlockSpec((1, C, TP), lambda n, p: (n, 0, p)),
                pl.BlockSpec((Cout, C), lambda n, p: (0, 0)),   # stays resident
                pl.BlockSpec((Cout, 1), lambda n, p: (0, 0)),   # stays resident
            ],
            out_specs=pl.BlockSpec((1, Cout, TP), lambda n, p: (n, 0, p)),
        ),
        compiler_params=pltpu.CompilerParams(
            dimension_semantics=("parallel", "parallel"),
            vmem_limit_bytes=32 * 1024 * 1024,
        ),
    )(x3, w_f, bias_f)

    # Nearest-neighbour 2x upsample of the (small) result: one fused
    # broadcast + contiguous reshape (conv/BN/ReLU are pointwise in space, so
    # upsample(conv(x)) == conv(upsample(x))).
    y = y.reshape(N, Cout, H, W)
    y = jnp.broadcast_to(y[:, :, :, None, :, None], (N, Cout, H, 2, W, 2))
    return y.reshape(N, Cout, 2 * H, 2 * W)


def _reference_forward(x, w, b, gamma, beta, rm, rv, eps=1e-5):
    """Plain-JAX reference mirroring the PyTorch forward (eval-mode BN)."""
    x_up = jnp.repeat(jnp.repeat(x, 2, axis=2), 2, axis=3)
    y = jnp.einsum("nchw,oc->nohw", x_up, w) + b[None, :, None, None]
    y = (y - rm[None, :, None, None]) / jnp.sqrt(rv[None, :, None, None] + eps)
    y = y * gamma[None, :, None, None] + beta[None, :, None, None]
    return jnp.maximum(y, 0.0)


if __name__ == "__main__":
    key = jax.random.PRNGKey(0)
    k_x, k_w, k_b, k_g, k_be, k_rm, k_rv = jax.random.split(key, 7)

    N, C, H, W = 2, 4, 16, 16           # ch = 4  ->  Cout = ch // 2 = 2
    Cout = C // 2

    x = jax.random.normal(k_x, (N, C, H, W), dtype=jnp.float32)

    # Deterministic synthetic params (Conv2d(ch, ch//2, 1, 1) + BatchNorm2d(ch//2))
    w = jax.random.normal(k_w, (Cout, C), dtype=jnp.float32) * 0.5   # (Cout,Cin,1,1) squeezed
    b = jax.random.normal(k_b, (Cout,), dtype=jnp.float32) * 0.1
    gamma = 1.0 + 0.1 * jax.random.normal(k_g, (Cout,), dtype=jnp.float32)
    beta = 0.1 * jax.random.normal(k_be, (Cout,), dtype=jnp.float32)
    running_mean = 0.1 * jax.random.normal(k_rm, (Cout,), dtype=jnp.float32)
    running_var = 1.0 + 0.1 * jax.random.uniform(k_rv, (Cout,), dtype=jnp.float32)

    ref = _reference_forward(x, w, b, gamma, beta, running_mean, running_var)

    # f32 compute path (exact check vs reference).
    out = upsampling_wo_skip(x, w, b, gamma, beta, running_mean, running_var)
    out = jax.block_until_ready(out)
    assert out.shape == (N, Cout, 2 * H, 2 * W), out.shape
    assert jnp.allclose(out, ref, atol=1e-4, rtol=1e-4), "f32 kernel mismatch vs reference"

    # bf16-MXU path (bf16 operands, f32 accumulation + epilogue, f32 output).
    out_bf16 = upsampling_wo_skip(x, w, b, gamma, beta, running_mean, running_var,
                                  compute_dtype=jnp.bfloat16)
    out_bf16 = jax.block_until_ready(out_bf16)
    assert jnp.allclose(out_bf16, ref, atol=5e-2, rtol=5e-2), "bf16 kernel mismatch vs reference"

    print("KERNEL_OK")
</pallas_src>

<mosaic_0001>
module attributes {stable_mosaic.version = 11 : i64} {
  func.func @_conv1x1_bn_relu_kernel(%arg0: i32, %arg1: i32, %arg2: memref<1x4x128xf32, #tpu.memory_space<vmem>>, %arg3: memref<2x4xf32, #tpu.memory_space<vmem>>, %arg4: memref<2x1xf32, #tpu.memory_space<vmem>>, %arg5: memref<1x2x128xf32, #tpu.memory_space<vmem>>) attributes {dimension_semantics = [#tpu.dimension_semantics<parallel>, #tpu.dimension_semantics<parallel>], iteration_bounds = array<i64: 2, 2>, scalar_prefetch = 0 : i64, scratch_operands = 0 : i64, tpu.core_type = #tpu.core_type<tc>, window_params = [{transform_indices = @transform_0, window_bounds = array<i64: 1, 4, 128>}, {pipeline_mode = #tpu.pipeline_mode<synchronous>, transform_indices = @transform_1, window_bounds = array<i64: 2, 4>}, {pipeline_mode = #tpu.pipeline_mode<synchronous>, transform_indices = @transform_2, window_bounds = array<i64: 2, 1>}, {transform_indices = @transform_3, window_bounds = array<i64: 1, 2, 128>}]} {
    %c0 = arith.constant 0 : index
    %c0_0 = arith.constant 0 : index
    %0 = vector.load %arg3[%c0, %c0_0] : memref<2x4xf32, #tpu.memory_space<vmem>>, vector<2x4xf32>
    %c0_1 = arith.constant 0 : index
    %c0_2 = arith.constant 0 : index
    %c0_3 = arith.constant 0 : index
    %1 = vector.load %arg2[%c0_1, %c0_2, %c0_3] : memref<1x4x128xf32, #tpu.memory_space<vmem>>, vector<1x4x128xf32>
    %2 = vector.shape_cast %1 : vector<1x4x128xf32> to vector<4x128xf32>
    %cst = arith.constant dense<0.000000e+00> : vector<2x128xf32>
    %3 = tpu.matmul %0, %2, %cst {dimension_numbers = #tpu.dot_dimension_numbers<[1], [0], [0], [1], [0, 0, 1, 1], [], []>} : vector<2x4xf32>, vector<4x128xf32>, vector<2x128xf32> -> vector<2x128xf32>
    %c0_4 = arith.constant 0 : index
    %c0_5 = arith.constant 0 : index
    %4 = vector.load %arg4[%c0_4, %c0_5] : memref<2x1xf32, #tpu.memory_space<vmem>>, vector<2x1xf32>
    %5 = vector.broadcast %4 : vector<2x1xf32> to vector<2x128xf32>
    %6 = arith.addf %3, %5 : vector<2x128xf32>
    %cst_6 = arith.constant 0.000000e+00 : f32
    %7 = vector.broadcast %cst_6 : f32 to vector<2x128xf32>
    %8 = arith.maximumf %6, %7 : vector<2x128xf32>
    %c0_7 = arith.constant 0 : index
    %c0_8 = arith.constant 0 : index
    %c0_9 = arith.constant 0 : index
    %9 = vector.load %arg5[%c0_7, %c0_8, %c0_9] : memref<1x2x128xf32, #tpu.memory_space<vmem>>, vector<1x2x128xf32>
    %10 = vector.shape_cast %9 : vector<1x2x128xf32> to vector<2x128xf32>
    %11 = vector.shape_cast %8 : vector<2x128xf32> to vector<1x2x128xf32>
    tpu.vector_store %arg5[%c0_7, %c0_8, %c0_9], %11 {strides = array<i32>} : memref<1x2x128xf32, #tpu.memory_space<vmem>>, vector<1x2x128xf32>,
    return
  }
  func.func @transform_0(%arg0: i32, %arg1: i32) -> (i32, i32, i32) {
    %c0_i32 = arith.constant 0 : i32
    %c0_i32_0 = arith.constant 0 : i32
    return %arg0, %c0_i32, %arg1 : i32, i32, i32
  }
  func.func @transform_1(%arg0: i32, %arg1: i32) -> (i32, i32) {
    %c0_i32 = arith.constant 0 : i32
    %c0_i32_0 = arith.constant 0 : i32
    %c0_i32_1 = arith.constant 0 : i32
    return %c0_i32, %c0_i32_0 : i32, i32
  }
  func.func @transform_2(%arg0: i32, %arg1: i32) -> (i32, i32) {
    %c0_i32 = arith.constant 0 : i32
    %c0_i32_0 = arith.constant 0 : i32
    %c0_i32_1 = arith.constant 0 : i32
    return %c0_i32, %c0_i32_0 : i32, i32
  }
  func.func @transform_3(%arg0: i32, %arg1: i32) -> (i32, i32, i32) {
    %c0_i32 = arith.constant 0 : i32
    %c0_i32_0 = arith.constant 0 : i32
    return %arg0, %c0_i32, %arg1 : i32, i32, i32
  }
}

</mosaic_0001>

<llo_original>
// kernel: tpu_custom_call.1
$region0: #{tpu_custom_call.1}
  #allocation0 [shape = 'u32[]', space=smem, size = 0x4, offset = 0x4, fixed_abs, tag = 'smem constant byte address 0x4 - core index']
  #allocation1 [shape = 'u32[144,128]{1,0:T(1,128)}', space=vmem, size = 0x12000, scoped, tag = 'internal scratch']
  %s0 = inlined_call_operand.hbm [shape: f32[2,4,256], index: 0, kind: input, shape index: {}]
  %s1 = inlined_call_operand.vmem [shape: f32[2,4], index: 1, kind: input, shape index: {}]
  %s2 = inlined_call_operand.vmem [shape: f32[2,1], index: 2, kind: input, shape index: {}]
  %s3 = inlined_call_operand.hbm [shape: f32[2,2,256], index: 3, kind: output, shape index: {}]
  %s4 = sld [smem:[#allocation0]]
  $region49: #{tpu_custom_call.1} parent=0
    _
  %s6 = ssub.s32 1, %s4
  %s7 = scalar_select 0, %s6, %s4
  $region1: #{tpu_custom_call.1} parent=0
    #allocation2 [shape = 'u8[4096]{0}', space=vmem, size = 0x1000, scoped, tag = 'input window, operand 0']
    #allocation3 [shape = 's32[2]{0}', space=sflag, size = 0x8, scoped, tag = 'scoped memory for tpu_custom_call.1']
    #allocation4 [shape = 's32[2]{0}', space=sflag, size = 0x8, scoped, tag = 'scoped memory for tpu_custom_call.1']
    #allocation5 [shape = 'u8[2048]{0}', space=vmem, size = 0x800, scoped, tag = 'output window, operand 0']
    %8 = vsyncpa [#allocation3], 0
    %s9 = scalar_lea.sflag [#allocation3], 1
    %10 = vsyncpa %s9, 0
    %11 = vsyncpa [#allocation4], 0
    %s12 = scalar_lea.sflag [#allocation4], 1
    %13 = vsyncpa %s12, 0
    loop: start=0, step=1, limit=6
    $region2: #{tpu_custom_call.1} parent=1 // loop_pre_header
      _
    $region3: #{tpu_custom_call.1} parent=1 // loop_header
      %s15 = sphi 0, %s19
      %p16 = scmp.ge.s32.totalorder %s15, 6
      %s22 = sphi 0, %s34
      %s23 = sphi 0, %s30
      %s24 = sphi 0, %s22
      %s25 = sphi 0, %s23
      %s26 = sphi 0, %s24
      %s27 = sphi 0, %s25
      %s39 = sphi 0, %s41
      %s42 = sphi 0, %s39
      %s43 = sphi 0, %s42
      %s59 = sphi 0, %s43
      %s63 = sphi 0, %s63
      %s65 = sphi 0, %s63
      %s66 = sphi 0, %s65
      %s80 = sphi 0, %s66
      %s84 = sphi 0, %s84
      %s86 = sphi 0, %s84
      %s87 = sphi 0, %s86
      %s101 = sphi 0, %s87
      %s109 = sphi 0, %s111
      %s112 = sphi 0, %s109
      %s113 = sphi 0, %s112
      %s129 = sphi 0, %s113
    $region4: #{tpu_custom_call.1} parent=1 // loop_header_branch
      %18 = sbr.rel (%p16) target = $region8
    $region5: #{tpu_custom_call.1} parent=1 // loop_body
      %s20 = ssub.s32 %s15, 1
      %s21 = ssub.s32 %s15, 2
      %s28 = sadd.s32 1, %s23
      %p29 = scmp.ge.s32.totalorder %s28, 2
      %s30 = scalar_select %p29, 0, %s28
      %s31 = sadd.s32 1, %s22
      %s32 = scalar_select %p29, %s31, %s22
      %p33 = scmp.ge.s32.totalorder %s32, 2
      %s34 = scalar_select %p33, 0, %s32
      %s35 = ssub.s32 %s22, %s34
      %s36 = ssub.s32 %s23, %s30
      %s37 = sor.u32 %s35, %s36
      %p38 = scmp.eq.s32.totalorder %s37, 0
      %s40 = sadd.s32 %s39, 1
      %s41 = scalar_select %p38, %s39, %s40
      %p44 = pneg %p38
      %p45 = scmp.eq.s32.totalorder %s15, 3
      %p46 = por %p44, %p45
      %p47 = scmp.ne.s32.totalorder %s39, %s42
      %p48 = scmp.eq.s32.totalorder %s15, 0
      %p49 = por %p47, %p48
      %p50 = scmp.ne.s32.totalorder %s39, %s42
      %p51 = scmp.eq.s32.totalorder %s20, 3
      %p52 = por %p50, %p51
      %p53 = scmp.ne.s32.totalorder %s42, %s43
      %p54 = scmp.eq.s32.totalorder %s20, 0
      %p55 = por %p53, %p54
      %p56 = scmp.ne.s32.totalorder %s42, %s43
      %p57 = scmp.eq.s32.totalorder %s21, 3
      %p58 = por %p56, %p57
      %p60 = scmp.ne.s32.totalorder %s43, %s59
      %p61 = scmp.eq.s32.totalorder %s21, 0
      %p62 = por %p60, %p61
      %s64 = sadd.s32 %s63, 1
      %p67 = scmp.eq.s32.totalorder %s15, 3
      %p68 = scmp.ne.s32.totalorder %s63, %s65
      %p69 = scmp.eq.s32.totalorder %s15, 0
      %p70 = por %p68, %p69
      %p71 = scmp.ne.s32.totalorder %s63, %s65
      %p72 = scmp.eq.s32.totalorder %s20, 3
      %p73 = por %p71, %p72
      %p74 = scmp.ne.s32.totalorder %s65, %s66
      %p75 = scmp.eq.s32.totalorder %s20, 0
      %p76 = por %p74, %p75
      %p77 = scmp.ne.s32.totalorder %s65, %s66
      %p78 = scmp.eq.s32.totalorder %s21, 3
      %p79 = por %p77, %p78
      %p81 = scmp.ne.s32.totalorder %s66, %s80
      %p82 = scmp.eq.s32.totalorder %s21, 0
      %p83 = por %p81, %p82
      %s85 = sadd.s32 %s84, 1
      %p88 = scmp.eq.s32.totalorder %s15, 3
      %p89 = scmp.ne.s32.totalorder %s84, %s86
      %p90 = scmp.eq.s32.totalorder %s15, 0
      %p91 = por %p89, %p90
      %p92 = scmp.ne.s32.totalorder %s84, %s86
      %p93 = scmp.eq.s32.totalorder %s20, 3
      %p94 = por %p92, %p93
      %p95 = scmp.ne.s32.totalorder %s86, %s87
      %p96 = scmp.eq.s32.totalorder %s20, 0
      %p97 = por %p95, %p96
      %p98 = scmp.ne.s32.totalorder %s86, %s87
      %p99 = scmp.eq.s32.totalorder %s21, 3
      %p100 = por %p98, %p99
      %p102 = scmp.ne.s32.totalorder %s87, %s101
      %p103 = scmp.eq.s32.totalorder %s21, 0
      %p104 = por %p102, %p103
      %s105 = ssub.s32 %s22, %s34
      %s106 = ssub.s32 %s23, %s30
      %s107 = sor.u32 %s105, %s106
      %p108 = scmp.eq.s32.totalorder %s107, 0
      %s110 = sadd.s32 %s109, 1
      %s111 = scalar_select %p108, %s109, %s110
      %p114 = pneg %p108
      %p115 = scmp.eq.s32.totalorder %s15, 3
      %p116 = por %p114, %p115
      %p117 = scmp.ne.s32.totalorder %s109, %s112
      %p118 = scmp.eq.s32.totalorder %s15, 0
      %p119 = por %p117, %p118
      %p120 = scmp.ne.s32.totalorder %s109, %s112
      %p121 = scmp.eq.s32.totalorder %s20, 3
      %p122 = por %p120, %p121
      %p123 = scmp.ne.s32.totalorder %s112, %s113
      %p124 = scmp.eq.s32.totalorder %s20, 0
      %p125 = por %p123, %p124
      %p126 = scmp.ne.s32.totalorder %s112, %s113
      %p127 = scmp.eq.s32.totalorder %s21, 3
      %p128 = por %p126, %p127
      %p130 = scmp.ne.s32.totalorder %s113, %s129
      %p131 = scmp.eq.s32.totalorder %s21, 0
      %p132 = por %p130, %p131
      %p133 = scmp.le.s32.totalorder 1, %s15
      %p134 = scmp.lt.s32.totalorder %s15, 5
      %p135 = pnand %p133, %p134
      %p136 = pneg %p135
      // Predicated region
      $region9: #{tpu_custom_call.1} parent=5 // pred_check
        _
      $region10: #{tpu_custom_call.1} parent=5 // pred_check_branch
        %138 = sbr.rel (%p135) target = $region12
      $region11: #{tpu_custom_call.1} parent=5 // pred_region
        %s139 = ssub.s32 %s15, 1
        // Predicated region
        $region13: #{tpu_custom_call.1} parent=11 // pred_check
          %p140 = pneg %p76
        $region14: #{tpu_custom_call.1} parent=11 // pred_check_branch
          %142 = sbr.rel (%p140) target = $region16
        $region15: #{tpu_custom_call.1} parent=11 // pred_region
          _
        $region16: #{tpu_custom_call.1} parent=11 // pred_fallthru
          _
        // Predicated region
        $region17: #{tpu_custom_call.1} parent=11 // pred_check
          %p143 = pneg %p97
        $region18: #{tpu_custom_call.1} parent=11 // pred_check_branch
          %145 = sbr.rel (%p143) target = $region20
        $region19: #{tpu_custom_call.1} parent=11 // pred_region
          _
        $region20: #{tpu_custom_call.1} parent=11 // pred_fallthru
          _
      $region12: #{tpu_custom_call.1} parent=5 // pred_fallthru
        _
      %p146 = scmp.lt.s32.totalorder %s15, 4
      // Predicated region
      $region21: #{tpu_custom_call.1} parent=5 // pred_check
        %p147 = pneg %p146
      $region22: #{tpu_custom_call.1} parent=5 // pred_check_branch
        %149 = sbr.rel (%p147) target = $region24
      $region23: #{tpu_custom_call.1} parent=5 // pred_region
        // Predicated region
        $region25: #{tpu_custom_call.1} parent=23 // pred_check
          %p150 = pneg %p49
        $region26: #{tpu_custom_call.1} parent=23 // pred_check_branch
          %152 = sbr.rel (%p150) target = $region28
        $region27: #{tpu_custom_call.1} parent=23 // pred_region
          %s153 = sand.u32 %s39, 1
          %s154 = scalar_lea.sflag [#allocation3], %s153
          %s155 = sand.u32 %s39, 1
          %s156 = smul.addr %s155, 4
          %s157 = scalar_lea.vmem [#allocation2], %s156
          %s159 = ssub.s32 64, 64
          %160 = vsyncadd %s154, %s159
          %s161 = smul.addr %s22, 2
          %s162 = sadd.s32 %s23, %s161
          %s163 = smul.addr %s162, 64
          %s164 = scalar_lea.hbm %s0, %s163
          %s166 = sshll.u32 %s157, 4
          %s167 = int_to_ptr.vmem [resolvable:$true] %s166
          %169 = dma.hbm_to_vmem [thread:$0]  %s164, 64, %s167, %s154
        $region28: #{tpu_custom_call.1} parent=23 // pred_fallthru
          _
      $region24: #{tpu_custom_call.1} parent=5 // pred_fallthru
        _
      %p170 = scmp.le.s32.totalorder 1, %s15
      %p171 = scmp.lt.s32.totalorder %s15, 5
      %p172 = pnand %p170, %p171
      %p173 = pneg %p172
      // Predicated region
      $region29: #{tpu_custom_call.1} parent=5 // pred_check
        _
      $region30: #{tpu_custom_call.1} parent=5 // pred_check_branch
        %175 = sbr.rel (%p172) target = $region32
      $region31: #{tpu_custom_call.1} parent=5 // pred_region
        %s176 = ssub.s32 %s15, 1
        %s177 = sand.u32 %s42, 1
        %s178 = scalar_lea.sflag [#allocation3], %s177
        %s179 = sand.u32 %s42, 1
        %s180 = smul.addr %s179, 4
        %s181 = scalar_lea.vmem [#allocation2], %s180
        // Predicated region
        $region33: #{tpu_custom_call.1} parent=31 // pred_check
          %p182 = pneg %p55
        $region34: #{tpu_custom_call.1} parent=31 // pred_check_branch
          %184 = sbr.rel (%p182) target = $region36
        $region35: #{tpu_custom_call.1} parent=31 // pred_region
          %185 = dma.done %s178, 64
        $region36: #{tpu_custom_call.1} parent=31 // pred_fallthru
          _
        %s186 = sand.u32 %s42, 1
        %s187 = scalar_lea.sflag [#allocation3], %s186
        %s188 = sand.u32 %s42, 1
        %s189 = smul.addr %s188, 4
        %s190 = scalar_lea.vmem [#allocation2], %s189
        %p191 = pneg %p55
        %p192 = pneg %p52
        %p193 = pneg %p76
        %p194 = pneg %p73
        %p195 = pneg %p97
        %p196 = pneg %p94
        %p197 = pneg %p125
        %p198 = pneg %p122
        %s199 = sand.u32 %s112, 1
        %s200 = scalar_lea.sflag [#allocation4], %s199
        %s201 = sand.u32 %s112, 1
        %s202 = smul.addr %s201, 2
        %s203 = scalar_lea.vmem [#allocation5], %s202
        %v204 = vld [vmem:[%s1] sm:$0x3]
        %v205 = vld [vmem:[%s181] sm:$0xf]
        %v206 = vld [vmem:[%s2] sm:$0x3]
        %208 = vset.pattern.permute.xlu0 0
        %209 = vperm.xlu0 %208, %v206
        %v210 = vpop.permute.xlu0 %209
        %vm212 = vcmask 31744
        %v214 = vsel %vm212, %v204, 0
        %vm216 = vcmask 1043456
        %v218 = vsel %vm216, %v205, 0
        %220 = vmatprep.subr.mxu0 0.0
        %221 = vmatpush1.msra.mxu0 0.0
        %222 = vmatprep.subr.mxu0 0.0
        %223 = vmatpush1.msra.mxu0 0.0
        %224 = vmatprep.subr.mxu0 0.0
        %225 = vmatpush1.msra.mxu0 0.0
        %226 = vmatprep.subr.mxu0 0.0
        %227 = vmatpush1.msra.mxu0 0.0
        %228 = vmatprep.subr.mxu0 0.0
        %229 = vmatpush1.msra.mxu0 0.0
        %230 = vmatprep.subr.mxu0 0.0
        %231 = vmatpush1.msra.mxu0 0.0
        %232 = vmatprep.subr.mxu0 0.0
        %233 = vmatpush1.msra.mxu0 0.0
        %234 = vmatprep.subr.mxu0 0.0
        %235 = vmatpush1.msra.mxu0 0.0
        %236 = vmatprep.subr.mxu0 0.0
        %237 = vmatpush1.msra.mxu0 0.0
        %238 = vmatprep.subr.mxu0 0.0
        %239 = vmatpush1.msra.mxu0 0.0
        %240 = vmatprep.subr.mxu0 0.0
        %241 = vmatpush1.msra.mxu0 0.0
        %242 = vmatprep.subr.mxu0 0.0
        %243 = vmatpush1.msra.mxu0 0.0
        %244 = vmatprep.subr.mxu0 0.0
        %245 = vmatpush1.msra.mxu0 0.0
        %246 = vmatprep.subr.mxu0 0.0
        %247 = vmatpush1.msra.mxu0 0.0
        %248 = vmatprep.subr.mxu0 0.0
        %249 = vmatpush1.msra.mxu0 0.0
        %250 = vmatprep.subr.mxu0 0.0
        %251 = vmatpush1.msra.mxu0 %v218
        %252 = vmatprep.subr.mxu0 0.0
        %253 = vmatpush2.msra.mxu0 0.0
        %254 = vmatprep.subr.mxu0 0.0
        %255 = vmatpush2.msra.mxu0 0.0
        %256 = vmatprep.subr.mxu0 0.0
        %257 = vmatpush2.msra.mxu0 0.0
        %258 = vmatprep.subr.mxu0 0.0
        %259 = vmatpush2.msra.mxu0 0.0
        %260 = vmatprep.subr.mxu0 0.0
        %261 = vmatpush2.msra.mxu0 0.0
        %262 = vmatprep.subr.mxu0 0.0
        %263 = vmatpush2.msra.mxu0 0.0
        %264 = vmatprep.subr.mxu0 0.0
        %265 = vmatpush2.msra.mxu0 0.0
        %266 = vmatprep.subr.mxu0 0.0
        %267 = vmatpush2.msra.mxu0 0.0
        %268 = vmatprep.subr.mxu0 0.0
        %269 = vmatpush2.msra.mxu0 0.0
        %270 = vmatprep.subr.mxu0 0.0
        %271 = vmatpush2.msra.mxu0 0.0
        %272 = vmatprep.subr.mxu0 0.0
        %273 = vmatpush2.msra.mxu0 0.0
        %274 = vmatprep.subr.mxu0 0.0
        %275 = vmatpush2.msra.mxu0 0.0
        %276 = vmatprep.subr.mxu0 0.0
        %277 = vmatpush2.msra.mxu0 0.0
        %278 = vmatprep.subr.mxu0 0.0
        %279 = vmatpush2.msra.mxu0 0.0
        %280 = vmatprep.subr.mxu0 0.0
        %281 = vmatpush2.msra.mxu0 0.0
        %282 = vmatprep.subr.mxu0 0.0
        %283 = vmatpush2.msra.mxu0 0.0
        %284 = vmatprep.mubr.f32.mxu0 0.0
        %285 = vmatmul.mubr.f32.gmra.mxu0 %v214
        %v286 = vpop.f32.mrf.mxu0
        %v287 = vadd.f32 %v210, %v286
        %v288 = vpop.f32.mrf.mxu0
        %289 = vdwg.mxu0
        %v290 = vmax.f32 %v287, 0.0
        %291 = vst [vmem:[%s203] sm:$0x3] %v290
        %s292 = sand.u32 %s112, 1
        %s293 = scalar_lea.sflag [#allocation4], %s292
        %s294 = sand.u32 %s112, 1
        %s295 = smul.addr %s294, 2
        %s296 = scalar_lea.vmem [#allocation5], %s295
        // Predicated region
        $region37: #{tpu_custom_call.1} parent=31 // pred_check
          %p297 = pneg %p122
        $region38: #{tpu_custom_call.1} parent=31 // pred_check_branch
          %299 = sbr.rel (%p297) target = $region40
        $region39: #{tpu_custom_call.1} parent=31 // pred_region
          %s301 = ssub.s32 32, 32
          %302 = vsyncadd %s293, %s301
          %s303 = smul.addr %s24, 2
          %s304 = sadd.s32 %s25, %s303
          %s305 = smul.addr %s304, 32
          %s306 = scalar_lea.hbm %s3, %s305
          %s308 = sshll.u32 %s296, 4
          %s309 = int_to_ptr.vmem [resolvable:$true] %s308
          %311 = dma.vmem_to_hbm [thread:$0]  %s309, 32, %s306, %s293
        $region40: #{tpu_custom_call.1} parent=31 // pred_fallthru
          _
      $region32: #{tpu_custom_call.1} parent=5 // pred_fallthru
        _
      %p312 = scmp.le.s32.totalorder 2, %s15
      // Predicated region
      $region41: #{tpu_custom_call.1} parent=5 // pred_check
        %p313 = pneg %p312
      $region42: #{tpu_custom_call.1} parent=5 // pred_check_branch
        %315 = sbr.rel (%p313) target = $region44
      $region43: #{tpu_custom_call.1} parent=5 // pred_region
        %s316 = ssub.s32 %s15, 2
        // Predicated region
        $region45: #{tpu_custom_call.1} parent=43 // pred_check
          %p317 = pneg %p128
        $region46: #{tpu_custom_call.1} parent=43 // pred_check_branch
          %319 = sbr.rel (%p317) target = $region48
        $region47: #{tpu_custom_call.1} parent=43 // pred_region
          %s320 = sand.u32 %s113, 1
          %s321 = scalar_lea.sflag [#allocation4], %s320
          %s322 = sand.u32 %s113, 1
          %s323 = smul.addr %s322, 2
          %s324 = scalar_lea.vmem [#allocation5], %s323
          %325 = dma.done %s321, 32
        $region48: #{tpu_custom_call.1} parent=43 // pred_fallthru
          _
      $region44: #{tpu_custom_call.1} parent=5 // pred_fallthru
        _
    $region6: #{tpu_custom_call.1} parent=1 // loop_footer
      %s19 = sadd.s32 1, %s15
    $region7: #{tpu_custom_call.1} parent=1 // loop_footer_branch
      %14 = sbr.rel target = $region3
    $region8: #{tpu_custom_call.1} parent=1 // loop_exit
      _
    %326 = vsyncpa [#allocation3], 1
    %s327 = scalar_lea.sflag [#allocation3], 1
    %328 = vsyncpa %s327, 1
    %329 = vsyncpa [#allocation4], 1
    %s330 = scalar_lea.sflag [#allocation4], 1
    %331 = vsyncpa %s330, 1

</llo_original>
